<compile_context>
chip_gen: v7x
topology: tpu7x:2x2x1
jax: 0.10.0
libtpu: 0.0.40
codegen_flags: <defaults>
</compile_context>

<pallas_src>
import jax
import jax.numpy as jnp
from jax.experimental import pallas as pl
from jax.experimental.pallas import tpu as pltpu


def mlp_kernel(ids_ref, embed_ref, w1_ref, b1_ref, w2_ref, b2_ref,
               w3r_ref, b3_ref, out_ref):
    # ids_ref:  (TB, S) int32        embed_ref: (V, E) f32
    # w1_ref:   (E, H) f32           w2_ref:    (H, H) f32
    # b1/b2:    (1, H) f32 VMEM      w3r_ref:   (1, H) f32
    # b3_ref:   (1, 1) f32 SMEM      out_ref:   (TB, 128) f32
    TB, S = ids_ref.shape
    V = embed_ref.shape[0]

    ids = ids_ref[...]                                            # (TB, S)

    # Fused embedding gather + sum over seq without a (TB, S, V) intermediate:
    #   counts[b, v] = #{s : ids[b, s] == v}  ->  counts @ embed = sum_s e[b,s,:]
    # Note: out-of-range ids (<0 or >=V) silently contribute a zero row; inputs
    # are assumed in range (matching a valid nn.Embedding lookup).
    lane_v = jax.lax.broadcasted_iota(jnp.int32, (TB, V), 1)      # (TB, V)
    counts = jnp.zeros((TB, V), jnp.float32)
    for s in range(S):                                            # static unroll, S small
        tok = jax.lax.slice_in_dim(ids, s, s + 1, axis=1)         # (TB, 1)
        counts = counts + (tok == lane_v).astype(jnp.float32)
    # NOTE: at real vocab sizes, replace the count-matmul with a scalar-prefetch
    # ids + DMA row gather (embed table left in HBM via memory_space=pl.ANY).

    # counts <= S are exact in bf16; MXU is bf16-native on v5e/v6e/v7x.
    e_sum = jnp.dot(counts.astype(jnp.bfloat16),
                    embed_ref[...].astype(jnp.bfloat16),
                    preferred_element_type=jnp.float32)           # (TB, E)
    e_mean = e_sum * (1.0 / S)                                    # in-kernel mean scale

    # fc1 + ReLU
    h = jnp.dot(e_mean.astype(jnp.bfloat16),
                w1_ref[...].astype(jnp.bfloat16),
                preferred_element_type=jnp.float32) + b1_ref[...]
    h = jnp.maximum(h, 0.0)

    # fc2 + ReLU
    h = jnp.dot(h.astype(jnp.bfloat16),
                w2_ref[...].astype(jnp.bfloat16),
                preferred_element_type=jnp.float32) + b2_ref[...]
    h = jnp.maximum(h, 0.0)

    # fc3 (N=1): VPU multiply + lane reduce against the (1, H) weight row;
    # bias is a scalar from SMEM.
    out = jnp.sum(h * w3r_ref[...], axis=-1, keepdims=True) + b3_ref[0, 0]  # (TB, 1)

    # Lane-dense store: broadcast the column across 128 lanes (unmasked vst).
    out_ref[...] = jnp.broadcast_to(out, out_ref.shape)


def mlp_forward(x_ids, embed_table, w1, b1, w2, b2, w3_row, b3, *, batch_tile=8):
    B, S = x_ids.shape
    V, E = embed_table.shape
    H = w1.shape[1]
    TB = min(batch_tile, B)
    assert B % TB == 0, "batch must be divisible by the batch tile"
    num_tiles = B // TB

    out = pl.pallas_call(
        mlp_kernel,
        out_shape=jax.ShapeDtypeStruct((B, 128), jnp.float32),
        grid_spec=pl.GridSpec(
            grid=(num_tiles,),
            in_specs=[
                pl.BlockSpec((TB, S), lambda i: (i, 0)),           # token ids (batch-tiled)
                pl.BlockSpec((V, E), lambda i: (0, 0)),            # embedding table (resident)
                pl.BlockSpec((E, H), lambda i: (0, 0)),            # w1
                pl.BlockSpec((1, H), lambda i: (0, 0)),            # b1
                pl.BlockSpec((H, H), lambda i: (0, 0)),            # w2
                pl.BlockSpec((1, H), lambda i: (0, 0)),            # b2
                pl.BlockSpec((1, H), lambda i: (0, 0)),            # w3 row (lane-dense)
                pl.BlockSpec(memory_space=pltpu.MemorySpace.SMEM), # b3 scalar
            ],
            out_specs=pl.BlockSpec((TB, 128), lambda i: (i, 0)),
        ),
        compiler_params=pltpu.CompilerParams(
            dimension_semantics=("parallel",),          # shard batch tiles across TCs (v7x)
            vmem_limit_bytes=32 * 1024 * 1024,          # explicit VMEM budget
        ),
    )(x_ids, embed_table, w1, b1, w2, b2, w3_row, b3)

    return out[:, 0]                                    # squeeze(1) -> (B,)


if __name__ == "__main__":
    # Small config consistent with the module's forward.
    batch, seq = 16, 8
    vocab_size, embedding_dim, hidden_size = 64, 32, 32

    key = jax.random.PRNGKey(0)
    k_ids, k_emb, k_w1, k_b1, k_w2, k_b2, k_w3, k_b3 = jax.random.split(key, 8)

    x_ids = jax.random.randint(k_ids, (batch, seq), 0, vocab_size, dtype=jnp.int32)
    embed_table = jax.random.normal(k_emb, (vocab_size, embedding_dim), jnp.float32) * 0.1
    # Linear weights stored (in, out) so the kernel computes x @ W + b.
    w1 = jax.random.normal(k_w1, (embedding_dim, hidden_size), jnp.float32) * 0.1
    b1 = jax.random.normal(k_b1, (1, hidden_size), jnp.float32) * 0.1
    w2 = jax.random.normal(k_w2, (hidden_size, hidden_size), jnp.float32) * 0.1
    b2 = jax.random.normal(k_b2, (1, hidden_size), jnp.float32) * 0.1
    # fc3 weight kept in PyTorch's native (out=1, in=H) row layout (lane-dense).
    w3_row = jax.random.normal(k_w3, (1, hidden_size), jnp.float32) * 0.1
    b3 = jax.random.normal(k_b3, (1, 1), jnp.float32) * 0.1

    out = mlp_forward(x_ids, embed_table, w1, b1, w2, b2, w3_row, b3)
    out = jax.block_until_ready(out)

    # Reference in plain JAX (same math as the PyTorch forward), full f32.
    e = embed_table[x_ids]                   # (B, S, E)
    h = e.mean(axis=1)                       # (B, E)
    h = jnp.maximum(h @ w1 + b1, 0.0)
    h = jnp.maximum(h @ w2 + b2, 0.0)
    ref = (h @ w3_row.T + b3)[:, 0]          # (B,)

    assert out.shape == (batch,)
    # Tolerance loosened vs pure-f32 because the kernel feeds bf16 operands to
    # the MXU (f32 accumulation); observed error is O(1e-3).
    assert jnp.allclose(out, ref, atol=2e-2, rtol=2e-2)

    print("KERNEL_OK")
</pallas_src>

<mosaic_0001>
module attributes {stable_mosaic.version = 11 : i64} {
  func.func @mlp_kernel(%arg0: i32, %arg1: memref<8x8xi32, #tpu.memory_space<vmem>>, %arg2: memref<64x32xf32, #tpu.memory_space<vmem>>, %arg3: memref<32x32xf32, #tpu.memory_space<vmem>>, %arg4: memref<1x32xf32, #tpu.memory_space<vmem>>, %arg5: memref<32x32xf32, #tpu.memory_space<vmem>>, %arg6: memref<1x32xf32, #tpu.memory_space<vmem>>, %arg7: memref<1x32xf32, #tpu.memory_space<vmem>>, %arg8: memref<1x1xf32, #tpu.memory_space<smem>>, %arg9: memref<8x128xf32, #tpu.memory_space<vmem>>) attributes {dimension_semantics = [#tpu.dimension_semantics<parallel>], iteration_bounds = array<i64: 2>, scalar_prefetch = 0 : i64, scratch_operands = 0 : i64, tpu.core_type = #tpu.core_type<tc>, window_params = [{transform_indices = @transform_0, window_bounds = array<i64: 8, 8>}, {pipeline_mode = #tpu.pipeline_mode<synchronous>, transform_indices = @transform_1, window_bounds = array<i64: 64, 32>}, {pipeline_mode = #tpu.pipeline_mode<synchronous>, transform_indices = @transform_2, window_bounds = array<i64: 32, 32>}, {pipeline_mode = #tpu.pipeline_mode<synchronous>, transform_indices = @transform_3, window_bounds = array<i64: 1, 32>}, {pipeline_mode = #tpu.pipeline_mode<synchronous>, transform_indices = @transform_4, window_bounds = array<i64: 32, 32>}, {pipeline_mode = #tpu.pipeline_mode<synchronous>, transform_indices = @transform_5, window_bounds = array<i64: 1, 32>}, {pipeline_mode = #tpu.pipeline_mode<synchronous>, transform_indices = @transform_6, window_bounds = array<i64: 1, 32>}, {transform_indices = @transform_7, window_bounds = array<i64: 1, 1>}, {transform_indices = @transform_8, window_bounds = array<i64: 8, 128>}]} {
    %c0 = arith.constant 0 : index
    %c0_0 = arith.constant 0 : index
    %0 = vector.load %arg1[%c0, %c0_0] : memref<8x8xi32, #tpu.memory_space<vmem>>, vector<8x8xi32>
    %1 = tpu.iota {dimensions = array<i32: 1>} : vector<8x64xi32>
    %cst = arith.constant 0.000000e+00 : f32
    %2 = vector.broadcast %cst : f32 to vector<8x64xf32>
    %3 = vector.extract_strided_slice %0 {offsets = [0, 0], sizes = [8, 1], strides = [1, 1]} : vector<8x8xi32> to vector<8x1xi32>
    %4 = vector.broadcast %3 : vector<8x1xi32> to vector<8x64xi32>
    %5 = arith.cmpi eq, %4, %1 : vector<8x64xi32>
    %6 = arith.extui %5 : vector<8x64xi1> to vector<8x64xi32>
    %7 = arith.sitofp %6 : vector<8x64xi32> to vector<8x64xf32>
    %8 = arith.addf %2, %7 : vector<8x64xf32>
    %9 = vector.extract_strided_slice %0 {offsets = [0, 1], sizes = [8, 1], strides = [1, 1]} : vector<8x8xi32> to vector<8x1xi32>
    %10 = vector.broadcast %9 : vector<8x1xi32> to vector<8x64xi32>
    %11 = arith.cmpi eq, %10, %1 : vector<8x64xi32>
    %12 = arith.extui %11 : vector<8x64xi1> to vector<8x64xi32>
    %13 = arith.sitofp %12 : vector<8x64xi32> to vector<8x64xf32>
    %14 = arith.addf %8, %13 : vector<8x64xf32>
    %15 = vector.extract_strided_slice %0 {offsets = [0, 2], sizes = [8, 1], strides = [1, 1]} : vector<8x8xi32> to vector<8x1xi32>
    %16 = vector.broadcast %15 : vector<8x1xi32> to vector<8x64xi32>
    %17 = arith.cmpi eq, %16, %1 : vector<8x64xi32>
    %18 = arith.extui %17 : vector<8x64xi1> to vector<8x64xi32>
    %19 = arith.sitofp %18 : vector<8x64xi32> to vector<8x64xf32>
    %20 = arith.addf %14, %19 : vector<8x64xf32>
    %21 = vector.extract_strided_slice %0 {offsets = [0, 3], sizes = [8, 1], strides = [1, 1]} : vector<8x8xi32> to vector<8x1xi32>
    %22 = vector.broadcast %21 : vector<8x1xi32> to vector<8x64xi32>
    %23 = arith.cmpi eq, %22, %1 : vector<8x64xi32>
    %24 = arith.extui %23 : vector<8x64xi1> to vector<8x64xi32>
    %25 = arith.sitofp %24 : vector<8x64xi32> to vector<8x64xf32>
    %26 = arith.addf %20, %25 : vector<8x64xf32>
    %27 = vector.extract_strided_slice %0 {offsets = [0, 4], sizes = [8, 1], strides = [1, 1]} : vector<8x8xi32> to vector<8x1xi32>
    %28 = vector.broadcast %27 : vector<8x1xi32> to vector<8x64xi32>
    %29 = arith.cmpi eq, %28, %1 : vector<8x64xi32>
    %30 = arith.extui %29 : vector<8x64xi1> to vector<8x64xi32>
    %31 = arith.sitofp %30 : vector<8x64xi32> to vector<8x64xf32>
    %32 = arith.addf %26, %31 : vector<8x64xf32>
    %33 = vector.extract_strided_slice %0 {offsets = [0, 5], sizes = [8, 1], strides = [1, 1]} : vector<8x8xi32> to vector<8x1xi32>
    %34 = vector.broadcast %33 : vector<8x1xi32> to vector<8x64xi32>
    %35 = arith.cmpi eq, %34, %1 : vector<8x64xi32>
    %36 = arith.extui %35 : vector<8x64xi1> to vector<8x64xi32>
    %37 = arith.sitofp %36 : vector<8x64xi32> to vector<8x64xf32>
    %38 = arith.addf %32, %37 : vector<8x64xf32>
    %39 = vector.extract_strided_slice %0 {offsets = [0, 6], sizes = [8, 1], strides = [1, 1]} : vector<8x8xi32> to vector<8x1xi32>
    %40 = vector.broadcast %39 : vector<8x1xi32> to vector<8x64xi32>
    %41 = arith.cmpi eq, %40, %1 : vector<8x64xi32>
    %42 = arith.extui %41 : vector<8x64xi1> to vector<8x64xi32>
    %43 = arith.sitofp %42 : vector<8x64xi32> to vector<8x64xf32>
    %44 = arith.addf %38, %43 : vector<8x64xf32>
    %45 = vector.extract_strided_slice %0 {offsets = [0, 7], sizes = [8, 1], strides = [1, 1]} : vector<8x8xi32> to vector<8x1xi32>
    %46 = vector.broadcast %45 : vector<8x1xi32> to vector<8x64xi32>
    %47 = arith.cmpi eq, %46, %1 : vector<8x64xi32>
    %48 = arith.extui %47 : vector<8x64xi1> to vector<8x64xi32>
    %49 = arith.sitofp %48 : vector<8x64xi32> to vector<8x64xf32>
    %50 = arith.addf %44, %49 : vector<8x64xf32>
    %51 = arith.truncf %50 : vector<8x64xf32> to vector<8x64xbf16>
    %c0_1 = arith.constant 0 : index
    %c0_2 = arith.constant 0 : index
    %52 = vector.load %arg2[%c0_1, %c0_2] : memref<64x32xf32, #tpu.memory_space<vmem>>, vector<64x32xf32>
    %53 = arith.truncf %52 : vector<64x32xf32> to vector<64x32xbf16>
    %cst_3 = arith.constant dense<0.000000e+00> : vector<8x32xf32>
    %54 = tpu.matmul %51, %53, %cst_3 {dimension_numbers = #tpu.dot_dimension_numbers<[1], [0], [0], [1], [0, 0, 1, 1], [], []>} : vector<8x64xbf16>, vector<64x32xbf16>, vector<8x32xf32> -> vector<8x32xf32>
    %cst_4 = arith.constant 1.250000e-01 : f32
    %55 = vector.broadcast %cst_4 : f32 to vector<8x32xf32>
    %56 = arith.mulf %54, %55 : vector<8x32xf32>
    %57 = arith.truncf %56 : vector<8x32xf32> to vector<8x32xbf16>
    %c0_5 = arith.constant 0 : index
    %c0_6 = arith.constant 0 : index
    %58 = vector.load %arg3[%c0_5, %c0_6] : memref<32x32xf32, #tpu.memory_space<vmem>>, vector<32x32xf32>
    %59 = arith.truncf %58 : vector<32x32xf32> to vector<32x32xbf16>
    %cst_7 = arith.constant dense<0.000000e+00> : vector<8x32xf32>
    %60 = tpu.matmul %57, %59, %cst_7 {dimension_numbers = #tpu.dot_dimension_numbers<[1], [0], [0], [1], [0, 0, 1, 1], [], []>} : vector<8x32xbf16>, vector<32x32xbf16>, vector<8x32xf32> -> vector<8x32xf32>
    %c0_8 = arith.constant 0 : index
    %c0_9 = arith.constant 0 : index
    %61 = vector.load %arg4[%c0_8, %c0_9] : memref<1x32xf32, #tpu.memory_space<vmem>>, vector<1x32xf32>
    %62 = vector.broadcast %61 : vector<1x32xf32> to vector<8x32xf32>
    %63 = arith.addf %60, %62 : vector<8x32xf32>
    %cst_10 = arith.constant 0.000000e+00 : f32
    %64 = vector.broadcast %cst_10 : f32 to vector<8x32xf32>
    %65 = arith.maximumf %63, %64 : vector<8x32xf32>
    %66 = arith.truncf %65 : vector<8x32xf32> to vector<8x32xbf16>
    %c0_11 = arith.constant 0 : index
    %c0_12 = arith.constant 0 : index
    %67 = vector.load %arg5[%c0_11, %c0_12] : memref<32x32xf32, #tpu.memory_space<vmem>>, vector<32x32xf32>
    %68 = arith.truncf %67 : vector<32x32xf32> to vector<32x32xbf16>
    %cst_13 = arith.constant dense<0.000000e+00> : vector<8x32xf32>
    %69 = tpu.matmul %66, %68, %cst_13 {dimension_numbers = #tpu.dot_dimension_numbers<[1], [0], [0], [1], [0, 0, 1, 1], [], []>} : vector<8x32xbf16>, vector<32x32xbf16>, vector<8x32xf32> -> vector<8x32xf32>
    %c0_14 = arith.constant 0 : index
    %c0_15 = arith.constant 0 : index
    %70 = vector.load %arg6[%c0_14, %c0_15] : memref<1x32xf32, #tpu.memory_space<vmem>>, vector<1x32xf32>
    %71 = vector.broadcast %70 : vector<1x32xf32> to vector<8x32xf32>
    %72 = arith.addf %69, %71 : vector<8x32xf32>
    %cst_16 = arith.constant 0.000000e+00 : f32
    %73 = vector.broadcast %cst_16 : f32 to vector<8x32xf32>
    %74 = arith.maximumf %72, %73 : vector<8x32xf32>
    %c0_17 = arith.constant 0 : index
    %c0_18 = arith.constant 0 : index
    %75 = vector.load %arg7[%c0_17, %c0_18] : memref<1x32xf32, #tpu.memory_space<vmem>>, vector<1x32xf32>
    %76 = vector.broadcast %75 : vector<1x32xf32> to vector<8x32xf32>
    %77 = arith.mulf %74, %76 : vector<8x32xf32>
    %cst_19 = arith.constant dense<0.000000e+00> : vector<8xf32>
    %78 = vector.multi_reduction <add>, %77, %cst_19 [1] : vector<8x32xf32> to vector<8xf32>
    %79 = vector.shape_cast %78 : vector<8xf32> to vector<8x1xf32>
    %c0_20 = arith.constant 0 : index
    %c0_21 = arith.constant 0 : index
    %80 = memref.load %arg8[%c0_20, %c0_21] : memref<1x1xf32, #tpu.memory_space<smem>>
    %81 = vector.broadcast %80 : f32 to vector<8x1xf32>
    %82 = arith.addf %79, %81 : vector<8x1xf32>
    %83 = vector.shape_cast %82 : vector<8x1xf32> to vector<8x1xf32>
    %84 = vector.broadcast %83 : vector<8x1xf32> to vector<8x128xf32>
    %c0_22 = arith.constant 0 : index
    %c0_23 = arith.constant 0 : index
    %85 = vector.load %arg9[%c0_22, %c0_23] : memref<8x128xf32, #tpu.memory_space<vmem>>, vector<8x128xf32>
    tpu.vector_store %arg9[%c0_22, %c0_23], %84 {strides = array<i32>} : memref<8x128xf32, #tpu.memory_space<vmem>>, vector<8x128xf32>,
    return
  }
  func.func @transform_0(%arg0: i32) -> (i32, i32) {
    %c0_i32 = arith.constant 0 : i32
    %c0_i32_0 = arith.constant 0 : i32
    return %arg0, %c0_i32 : i32, i32
  }
  func.func @transform_1(%arg0: i32) -> (i32, i32) {
    %c0_i32 = arith.constant 0 : i32
    %c0_i32_0 = arith.constant 0 : i32
    %c0_i32_1 = arith.constant 0 : i32
    return %c0_i32, %c0_i32_0 : i32, i32
  }
  func.func @transform_2(%arg0: i32) -> (i32, i32) {
    %c0_i32 = arith.constant 0 : i32
    %c0_i32_0 = arith.constant 0 : i32
    %c0_i32_1 = arith.constant 0 : i32
    return %c0_i32, %c0_i32_0 : i32, i32
  }
  func.func @transform_3(%arg0: i32) -> (i32, i32) {
    %c0_i32 = arith.constant 0 : i32
    %c0_i32_0 = arith.constant 0 : i32
    %c0_i32_1 = arith.constant 0 : i32
    return %c0_i32, %c0_i32_0 : i32, i32
  }
  func.func @transform_4(%arg0: i32) -> (i32, i32) {
    %c0_i32 = arith.constant 0 : i32
    %c0_i32_0 = arith.constant 0 : i32
    %c0_i32_1 = arith.constant 0 : i32
    return %c0_i32, %c0_i32_0 : i32, i32
  }
  func.func @transform_5(%arg0: i32) -> (i32, i32) {
    %c0_i32 = arith.constant 0 : i32
    %c0_i32_0 = arith.constant 0 : i32
    %c0_i32_1 = arith.constant 0 : i32
    return %c0_i32, %c0_i32_0 : i32, i32
  }
  func.func @transform_6(%arg0: i32) -> (i32, i32) {
    %c0_i32 = arith.constant 0 : i32
    %c0_i32_0 = arith.constant 0 : i32
    %c0_i32_1 = arith.constant 0 : i32
    return %c0_i32, %c0_i32_0 : i32, i32
  }
  func.func @transform_7(%arg0: i32) -> (i32, i32) {
    %c0_i32 = arith.constant 0 : i32
    %c0_i32_0 = arith.constant 0 : i32
    %c0_i32_1 = arith.constant 0 : i32
    return %c0_i32, %c0_i32_0 : i32, i32
  }
  func.func @transform_8(%arg0: i32) -> (i32, i32) {
    %c0_i32 = arith.constant 0 : i32
    %c0_i32_0 = arith.constant 0 : i32
    return %arg0, %c0_i32 : i32, i32
  }
}

</mosaic_0001>

<llo_original>
// kernel: tpu_custom_call.1
$region0: #{tpu_custom_call.1}
  #allocation0 [shape = 'u32[]', space=smem, size = 0x4, offset = 0x4, fixed_abs, tag = 'smem constant byte address 0x4 - core index']
  #allocation1 [shape = 'u32[144,128]{1,0:T(1,128)}', space=vmem, size = 0x12000, scoped, tag = 'internal scratch']
  #allocation2 [shape = 'f32[1,1]{1,0:T(1,128)S(6)}', space=smem, size = 0x200, scoped, tag = 'scoped memory for tpu_custom_call.1']
  %s0 = inlined_call_operand.vmem [shape: s32[16,8], index: 0, kind: input, shape index: {}]
  %s1 = inlined_call_operand.vmem [shape: f32[64,32], index: 1, kind: input, shape index: {}]
  %s2 = inlined_call_operand.vmem [shape: f32[32,32], index: 2, kind: input, shape index: {}]
  %s3 = inlined_call_operand.vmem [shape: f32[1,32], index: 3, kind: input, shape index: {}]
  %s4 = inlined_call_operand.vmem [shape: f32[32,32], index: 4, kind: input, shape index: {}]
  %s5 = inlined_call_operand.vmem [shape: f32[1,32], index: 5, kind: input, shape index: {}]
  %s6 = inlined_call_operand.vmem [shape: f32[1,32], index: 6, kind: input, shape index: {}]
  %s7 = inlined_call_operand.<no memory space> [shape: f32[1,1], index: 7, kind: input, shape index: {}]
  %s8 = inlined_call_operand.hbm [shape: f32[16,128], index: 8, kind: output, shape index: {}]
  %s9 = sld [smem:[#allocation0]]
  $region65: #{tpu_custom_call.1} parent=0
    _
  %s11 = ssub.s32 1, %s9
  %s12 = scalar_select 0, %s11, %s9
  %13 = sst [smem:[#allocation2]] %s7
  $region1: #{tpu_custom_call.1} parent=0
    #allocation3 [shape = 'u8[8192]{0}', space=vmem, size = 0x2000, scoped, tag = 'output window, operand 0']
    #allocation4 [shape = 's32[2]{0}', space=sflag, size = 0x8, scoped, tag = 'scoped memory for tpu_custom_call.1']
    %14 = vsyncpa [#allocation4], 0
    %s15 = scalar_lea.sflag [#allocation4], 1
    %16 = vsyncpa %s15, 0
    loop: start=0, step=1, limit=4
    $region2: #{tpu_custom_call.1} parent=1 // loop_pre_header
      _
    $region3: #{tpu_custom_call.1} parent=1 // loop_header
      %s18 = sphi 0, %s22
      %p19 = scmp.ge.s32.totalorder %s18, 4
      %s28 = sphi 0, %s30
      %s31 = sphi 0, %s28
      %s32 = sphi 0, %s31
      %s48 = sphi 0, %s32
      %s52 = sphi 0, %s52
      %s54 = sphi 0, %s52
      %s55 = sphi 0, %s54
      %s69 = sphi 0, %s55
      %s73 = sphi 0, %s73
      %s75 = sphi 0, %s73
      %s76 = sphi 0, %s75
      %s90 = sphi 0, %s76
      %s94 = sphi 0, %s94
      %s96 = sphi 0, %s94
      %s97 = sphi 0, %s96
      %s111 = sphi 0, %s97
      %s115 = sphi 0, %s115
      %s117 = sphi 0, %s115
      %s118 = sphi 0, %s117
      %s132 = sphi 0, %s118
      %s136 = sphi 0, %s136
      %s138 = sphi 0, %s136
      %s139 = sphi 0, %s138
      %s153 = sphi 0, %s139
      %s157 = sphi 0, %s157
      %s159 = sphi 0, %s157
      %s160 = sphi 0, %s159
      %s174 = sphi 0, %s160
      %s178 = sphi 0, %s178
      %s180 = sphi 0, %s178
      %s181 = sphi 0, %s180
      %s195 = sphi 0, %s181
      %s201 = sphi 0, %s203
      %s204 = sphi 0, %s201
      %s205 = sphi 0, %s204
      %s221 = sphi 0, %s205
    $region4: #{tpu_custom_call.1} parent=1 // loop_header_branch
      %21 = sbr.rel (%p19) target = $region8
    $region5: #{tpu_custom_call.1} parent=1 // loop_body
      %s23 = ssub.s32 %s18, 1
      %s24 = ssub.s32 %s18, 2
      %s25 = sadd.s32 %s18, 1
      %s26 = ssub.s32 %s18, %s25
      %p27 = scmp.eq.s32.totalorder %s26, 0
      %s29 = sadd.s32 %s28, 1
      %s30 = scalar_select %p27, %s28, %s29
      %p33 = pneg %p27
      %p34 = scmp.eq.s32.totalorder %s18, 1
      %p35 = por %p33, %p34
      %p36 = scmp.ne.s32.totalorder %s28, %s31
      %p37 = scmp.eq.s32.totalorder %s18, 0
      %p38 = por %p36, %p37
      %p39 = scmp.ne.s32.totalorder %s28, %s31
      %p40 = scmp.eq.s32.totalorder %s23, 1
      %p41 = por %p39, %p40
      %p42 = scmp.ne.s32.totalorder %s31, %s32
      %p43 = scmp.eq.s32.totalorder %s23, 0
      %p44 = por %p42, %p43
      %p45 = scmp.ne.s32.totalorder %s31, %s32
      %p46 = scmp.eq.s32.totalorder %s24, 1
      %p47 = por %p45, %p46
      %p49 = scmp.ne.s32.totalorder %s32, %s48
      %p50 = scmp.eq.s32.totalorder %s24, 0
      %p51 = por %p49, %p50
      %s53 = sadd.s32 %s52, 1
      %p56 = scmp.eq.s32.totalorder %s18, 1
      %p57 = scmp.ne.s32.totalorder %s52, %s54
      %p58 = scmp.eq.s32.totalorder %s18, 0
      %p59 = por %p57, %p58
      %p60 = scmp.ne.s32.totalorder %s52, %s54
      %p61 = scmp.eq.s32.totalorder %s23, 1
      %p62 = por %p60, %p61
      %p63 = scmp.ne.s32.totalorder %s54, %s55
      %p64 = scmp.eq.s32.totalorder %s23, 0
      %p65 = por %p63, %p64
      %p66 = scmp.ne.s32.totalorder %s54, %s55
      %p67 = scmp.eq.s32.totalorder %s24, 1
      %p68 = por %p66, %p67
      %p70 = scmp.ne.s32.totalorder %s55, %s69
      %p71 = scmp.eq.s32.totalorder %s24, 0
      %p72 = por %p70, %p71
      %s74 = sadd.s32 %s73, 1
      %p77 = scmp.eq.s32.totalorder %s18, 1
      %p78 = scmp.ne.s32.totalorder %s73, %s75
      %p79 = scmp.eq.s32.totalorder %s18, 0
      %p80 = por %p78, %p79
      %p81 = scmp.ne.s32.totalorder %s73, %s75
      %p82 = scmp.eq.s32.totalorder %s23, 1
      %p83 = por %p81, %p82
      %p84 = scmp.ne.s32.totalorder %s75, %s76
      %p85 = scmp.eq.s32.totalorder %s23, 0
      %p86 = por %p84, %p85
      %p87 = scmp.ne.s32.totalorder %s75, %s76
      %p88 = scmp.eq.s32.totalorder %s24, 1
      %p89 = por %p87, %p88
      %p91 = scmp.ne.s32.totalorder %s76, %s90
      %p92 = scmp.eq.s32.totalorder %s24, 0
      %p93 = por %p91, %p92
      %s95 = sadd.s32 %s94, 1
      %p98 = scmp.eq.s32.totalorder %s18, 1
      %p99 = scmp.ne.s32.totalorder %s94, %s96
      %p100 = scmp.eq.s32.totalorder %s18, 0
      %p101 = por %p99, %p100
      %p102 = scmp.ne.s32.totalorder %s94, %s96
      %p103 = scmp.eq.s32.totalorder %s23, 1
      %p104 = por %p102, %p103
      %p105 = scmp.ne.s32.totalorder %s96, %s97
      %p106 = scmp.eq.s32.totalorder %s23, 0
      %p107 = por %p105, %p106
      %p108 = scmp.ne.s32.totalorder %s96, %s97
      %p109 = scmp.eq.s32.totalorder %s24, 1
      %p110 = por %p108, %p109
      %p112 = scmp.ne.s32.totalorder %s97, %s111
      %p113 = scmp.eq.s32.totalorder %s24, 0
      %p114 = por %p112, %p113
      %s116 = sadd.s32 %s115, 1
      %p119 = scmp.eq.s32.totalorder %s18, 1
      %p120 = scmp.ne.s32.totalorder %s115, %s117
      %p121 = scmp.eq.s32.totalorder %s18, 0
      %p122 = por %p120, %p121
      %p123 = scmp.ne.s32.totalorder %s115, %s117
      %p124 = scmp.eq.s32.totalorder %s23, 1
      %p125 = por %p123, %p124
      %p126 = scmp.ne.s32.totalorder %s117, %s118
      %p127 = scmp.eq.s32.totalorder %s23, 0
      %p128 = por %p126, %p127
      %p129 = scmp.ne.s32.totalorder %s117, %s118
      %p130 = scmp.eq.s32.totalorder %s24, 1
      %p131 = por %p129, %p130
      %p133 = scmp.ne.s32.totalorder %s118, %s132
      %p134 = scmp.eq.s32.totalorder %s24, 0
      %p135 = por %p133, %p134
      %s137 = sadd.s32 %s136, 1
      %p140 = scmp.eq.s32.totalorder %s18, 1
      %p141 = scmp.ne.s32.totalorder %s136, %s138
      %p142 = scmp.eq.s32.totalorder %s18, 0
      %p143 = por %p141, %p142
      %p144 = scmp.ne.s32.totalorder %s136, %s138
      %p145 = scmp.eq.s32.totalorder %s23, 1
      %p146 = por %p144, %p145
      %p147 = scmp.ne.s32.totalorder %s138, %s139
      %p148 = scmp.eq.s32.totalorder %s23, 0
      %p149 = por %p147, %p148
      %p150 = scmp.ne.s32.totalorder %s138, %s139
      %p151 = scmp.eq.s32.totalorder %s24, 1
      %p152 = por %p150, %p151
      %p154 = scmp.ne.s32.totalorder %s139, %s153
      %p155 = scmp.eq.s32.totalorder %s24, 0
      %p156 = por %p154, %p155
      %s158 = sadd.s32 %s157, 1
      %p161 = scmp.eq.s32.totalorder %s18, 1
      %p162 = scmp.ne.s32.totalorder %s157, %s159
      %p163 = scmp.eq.s32.totalorder %s18, 0
      %p164 = por %p162, %p163
      %p165 = scmp.ne.s32.totalorder %s157, %s159
      %p166 = scmp.eq.s32.totalorder %s23, 1
      %p167 = por %p165, %p166
      %p168 = scmp.ne.s32.totalorder %s159, %s160
      %p169 = scmp.eq.s32.totalorder %s23, 0
      %p170 = por %p168, %p169
      %p171 = scmp.ne.s32.totalorder %s159, %s160
      %p172 = scmp.eq.s32.totalorder %s24, 1
      %p173 = por %p171, %p172
      %p175 = scmp.ne.s32.totalorder %s160, %s174
      %p176 = scmp.eq.s32.totalorder %s24, 0
      %p177 = por %p175, %p176
      %s179 = sadd.s32 %s178, 1
      %p182 = scmp.eq.s32.totalorder %s18, 1
      %p183 = scmp.ne.s32.totalorder %s178, %s180
      %p184 = scmp.eq.s32.totalorder %s18, 0
      %p185 = por %p183, %p184
      %p186 = scmp.ne.s32.totalorder %s178, %s180
      %p187 = scmp.eq.s32.totalorder %s23, 1
      %p188 = por %p186, %p187
      %p189 = scmp.ne.s32.totalorder %s180, %s181
      %p190 = scmp.eq.s32.totalorder %s23, 0
      %p191 = por %p189, %p190
      %p192 = scmp.ne.s32.totalorder %s180, %s181
      %p193 = scmp.eq.s32.totalorder %s24, 1
      %p194 = por %p192, %p193
      %p196 = scmp.ne.s32.totalorder %s181, %s195
      %p197 = scmp.eq.s32.totalorder %s24, 0
      %p198 = por %p196, %p197
      %s199 = ssub.s32 %s18, %s25
      %p200 = scmp.eq.s32.totalorder %s199, 0
      %s202 = sadd.s32 %s201, 1
      %s203 = scalar_select %p200, %s201, %s202
      %p206 = pneg %p200
      %p207 = scmp.eq.s32.totalorder %s18, 1
      %p208 = por %p206, %p207
      %p209 = scmp.ne.s32.totalorder %s201, %s204
      %p210 = scmp.eq.s32.totalorder %s18, 0
      %p211 = por %p209, %p210
      %p212 = scmp.ne.s32.totalorder %s201, %s204
      %p213 = scmp.eq.s32.totalorder %s23, 1
      %p214 = por %p212, %p213
      %p215 = scmp.ne.s32.totalorder %s204, %s205
      %p216 = scmp.eq.s32.totalorder %s23, 0
      %p217 = por %p215, %p216
      %p218 = scmp.ne.s32.totalorder %s204, %s205
      %p219 = scmp.eq.s32.totalorder %s24, 1
      %p220 = por %p218, %p219
      %p222 = scmp.ne.s32.totalorder %s205, %s221
      %p223 = scmp.eq.s32.totalorder %s24, 0
      %p224 = por %p222, %p223
      %p225 = scmp.le.s32.totalorder 1, %s18
      %p226 = scmp.lt.s32.totalorder %s18, 3
      %p227 = pnand %p225, %p226
      %p228 = pneg %p227
      // Predicated region
      $region9: #{tpu_custom_call.1} parent=5 // pred_check
        _
      $region10: #{tpu_custom_call.1} parent=5 // pred_check_branch
        %230 = sbr.rel (%p227) target = $region12
      $region11: #{tpu_custom_call.1} parent=5 // pred_region
        %s231 = ssub.s32 %s18, 1
        // Predicated region
        $region13: #{tpu_custom_call.1} parent=11 // pred_check
          %p232 = pneg %p65
        $region14: #{tpu_custom_call.1} parent=11 // pred_check_branch
          %234 = sbr.rel (%p232) target = $region16
        $region15: #{tpu_custom_call.1} parent=11 // pred_region
          _
        $region16: #{tpu_custom_call.1} parent=11 // pred_fallthru
          _
        // Predicated region
        $region17: #{tpu_custom_call.1} parent=11 // pred_check
          %p235 = pneg %p86
        $region18: #{tpu_custom_call.1} parent=11 // pred_check_branch
          %237 = sbr.rel (%p235) target = $region20
        $region19: #{tpu_custom_call.1} parent=11 // pred_region
          _
        $region20: #{tpu_custom_call.1} parent=11 // pred_fallthru
          _
        // Predicated region
        $region21: #{tpu_custom_call.1} parent=11 // pred_check
          %p238 = pneg %p107
        $region22: #{tpu_custom_call.1} parent=11 // pred_check_branch
          %240 = sbr.rel (%p238) target = $region24
        $region23: #{tpu_custom_call.1} parent=11 // pred_region
          _
        $region24: #{tpu_custom_call.1} parent=11 // pred_fallthru
          _
        // Predicated region
        $region25: #{tpu_custom_call.1} parent=11 // pred_check
          %p241 = pneg %p128
        $region26: #{tpu_custom_call.1} parent=11 // pred_check_branch
          %243 = sbr.rel (%p241) target = $region28
        $region27: #{tpu_custom_call.1} parent=11 // pred_region
          _
        $region28: #{tpu_custom_call.1} parent=11 // pred_fallthru
          _
        // Predicated region
        $region29: #{tpu_custom_call.1} parent=11 // pred_check
          %p244 = pneg %p149
        $region30: #{tpu_custom_call.1} parent=11 // pred_check_branch
          %246 = sbr.rel (%p244) target = $region32
        $region31: #{tpu_custom_call.1} parent=11 // pred_region
          _
        $region32: #{tpu_custom_call.1} parent=11 // pred_fallthru
          _
        // Predicated region
        $region33: #{tpu_custom_call.1} parent=11 // pred_check
          %p247 = pneg %p170
        $region34: #{tpu_custom_call.1} parent=11 // pred_check_branch
          %249 = sbr.rel (%p247) target = $region36
        $region35: #{tpu_custom_call.1} parent=11 // pred_region
          _
        $region36: #{tpu_custom_call.1} parent=11 // pred_fallthru
          _
        // Predicated region
        $region37: #{tpu_custom_call.1} parent=11 // pred_check
          %p250 = pneg %p191
        $region38: #{tpu_custom_call.1} parent=11 // pred_check_branch
          %252 = sbr.rel (%p250) target = $region40
        $region39: #{tpu_custom_call.1} parent=11 // pred_region
          _
        $region40: #{tpu_custom_call.1} parent=11 // pred_fallthru
          _
      $region12: #{tpu_custom_call.1} parent=5 // pred_fallthru
        _
      %p253 = scmp.lt.s32.totalorder %s18, 2
      // Predicated region
      $region41: #{tpu_custom_call.1} parent=5 // pred_check
        %p254 = pneg %p253
      $region42: #{tpu_custom_call.1} parent=5 // pred_check_branch
        %256 = sbr.rel (%p254) target = $region44
      $region43: #{tpu_custom_call.1} parent=5 // pred_region
        // Predicated region
        $region45: #{tpu_custom_call.1} parent=43 // pred_check
          %p257 = pneg %p38
        $region46: #{tpu_custom_call.1} parent=43 // pred_check_branch
          %259 = sbr.rel (%p257) target = $region48
        $region47: #{tpu_custom_call.1} parent=43 // pred_region
          %p260 = scmp.lt.s32.totalorder %s18, 1
          %s261 = scalar_select %p260, %s18, 1
          %s262 = smul.addr %s261, 8
          %s263 = scalar_lea.vmem %s0, %s262
        $region48: #{tpu_custom_call.1} parent=43 // pred_fallthru
          _
      $region44: #{tpu_custom_call.1} parent=5 // pred_fallthru
        _
      %p264 = scmp.le.s32.totalorder 1, %s18
      %p265 = scmp.lt.s32.totalorder %s18, 3
      %p266 = pnand %p264, %p265
      %p267 = pneg %p266
      // Predicated region
      $region49: #{tpu_custom_call.1} parent=5 // pred_check
        _
      $region50: #{tpu_custom_call.1} parent=5 // pred_check_branch
        %269 = sbr.rel (%p266) target = $region52
      $region51: #{tpu_custom_call.1} parent=5 // pred_region
        %s270 = ssub.s32 %s18, 1
        %p271 = scmp.lt.s32.totalorder %s23, 1
        %s272 = scalar_select %p271, %s23, 1
        %s273 = smul.addr %s272, 8
        %s274 = scalar_lea.vmem %s0, %s273
        %p275 = pneg %p44
        %p276 = pneg %p41
        %p277 = pneg %p65
        %p278 = pneg %p62
        %p279 = pneg %p86
        %p280 = pneg %p83
        %p281 = pneg %p107
        %p282 = pneg %p104
        %p283 = pneg %p128
        %p284 = pneg %p125
        %p285 = pneg %p149
        %p286 = pneg %p146
        %p287 = pneg %p170
        %p288 = pneg %p167
        %p289 = pneg %p191
        %p290 = pneg %p188
        %p291 = pneg %p217
        %p292 = pneg %p214
        %s293 = sand.u32 %s204, 1
        %s294 = scalar_lea.sflag [#allocation4], %s293
        %s295 = sand.u32 %s204, 1
        %s296 = smul.addr %s295, 8
        %s297 = scalar_lea.vmem [#allocation3], %s296
        %p298 = scmp.lt.s32.totalorder %s23, 1
        %s299 = scalar_select %p298, %s23, 1
        %s300 = smul.addr %s299, 8
        %s301 = scalar_lea.vmem %s0, %s300
        %v303 = vld [vmem:[%s301] sm:$0xff]
        %v304 = vlaneseq
        %v305 = vand.u32 %v304, 127
        %306 = vset.pattern.permute.xlu0 0
        %307 = vperm.xlu0 %306, %v303
        %v308 = vpop.permute.xlu0 %307
        %vm309 = vcmp.eq.s32.totalorder %v308, %v305
        %v310 = vsel %vm309, 1, 0
        %v311 = vcvt.s32.f32 %v310
        %v312 = vadd.f32 %v311, 0.0
        %313 = vset.pattern.permute.xlu0 1
        %314 = vperm.xlu0 %313, %v303
        %v315 = vpop.permute.xlu0 %314
        %vm316 = vcmp.eq.s32.totalorder %v315, %v305
        %v317 = vsel %vm316, 1, 0
        %v318 = vcvt.s32.f32 %v317
        %v319 = vadd.f32 %v312, %v318
        %320 = vset.pattern.permute.xlu0 2
        %321 = vperm.xlu0 %320, %v303
        %v322 = vpop.permute.xlu0 %321
        %vm323 = vcmp.eq.s32.totalorder %v322, %v305
        %v324 = vsel %vm323, 1, 0
        %v325 = vcvt.s32.f32 %v324
        %v326 = vadd.f32 %v319, %v325
        %327 = vset.pattern.permute.xlu0 3
        %328 = vperm.xlu0 %327, %v303
        %v329 = vpop.permute.xlu0 %328
        %vm330 = vcmp.eq.s32.totalorder %v329, %v305
        %v331 = vsel %vm330, 1, 0
        %v332 = vcvt.s32.f32 %v331
        %v333 = vadd.f32 %v326, %v332
        %334 = vset.pattern.permute.xlu0 4
        %335 = vperm.xlu0 %334, %v303
        %v336 = vpop.permute.xlu0 %335
        %vm337 = vcmp.eq.s32.totalorder %v336, %v305
        %v338 = vsel %vm337, 1, 0
        %v339 = vcvt.s32.f32 %v338
        %v340 = vadd.f32 %v333, %v339
        %341 = vset.pattern.permute.xlu0 5
        %342 = vperm.xlu0 %341, %v303
        %v343 = vpop.permute.xlu0 %342
        %vm344 = vcmp.eq.s32.totalorder %v343, %v305
        %v345 = vsel %vm344, 1, 0
        %v346 = vcvt.s32.f32 %v345
        %v347 = vadd.f32 %v340, %v346
        %348 = vset.pattern.permute.xlu0 6
        %349 = vperm.xlu0 %348, %v303
        %v350 = vpop.permute.xlu0 %349
        %vm351 = vcmp.eq.s32.totalorder %v350, %v305
        %v352 = vsel %vm351, 1, 0
        %v353 = vcvt.s32.f32 %v352
        %v354 = vadd.f32 %v347, %v353
        %355 = vset.pattern.permute.xlu0 7
        %356 = vperm.xlu0 %355, %v303
        %v357 = vpop.permute.xlu0 %356
        %vm358 = vcmp.eq.s32.totalorder %v357, %v305
        %v359 = vsel %vm358, 1, 0
        %v360 = vcvt.s32.f32 %v359
        %v361 = vadd.f32 %v354, %v360
        %v362 = vpack.c.bf16 %v361, %v361
        %v363 = vld [vmem:[%s1] sm:$0xff]
        %v364 = vld [vmem:[%s1 + $0x8] sm:$0xff]
        %v365 = vld [vmem:[%s1 + $0x10] sm:$0xff]
        %v366 = vld [vmem:[%s1 + $0x18] sm:$0xff]
        %v367 = vld [vmem:[%s1 + $0x20] sm:$0xff]
        %v368 = vld [vmem:[%s1 + $0x28] sm:$0xff]
        %v369 = vld [vmem:[%s1 + $0x30] sm:$0xff]
        %v370 = vld [vmem:[%s1 + $0x38] sm:$0xff]
        %v371 = vpack.c.bf16 %v364, %v363
        %v372 = vpack.c.bf16 %v366, %v365
        %v373 = vpack.c.bf16 %v368, %v367
        %v374 = vpack.c.bf16 %v370, %v369
        %vm375 = vcmask 523264
        %v377 = vsel %vm375, %v362, 0
        %379 = vmatprep.subr.bf16.mxu0 0
        %380 = vmatpush1.bf16.msra.mxu0 %v371
        %381 = vmatprep.subr.bf16.mxu0 0
        %382 = vmatpush1.bf16.msra.mxu0 %v372
        %383 = vmatprep.subr.bf16.mxu0 0
        %384 = vmatpush1.bf16.msra.mxu0 %v373
        %385 = vmatprep.subr.bf16.mxu0 0
        %386 = vmatpush1.bf16.msra.mxu0 %v374
        %387 = vmatprep.subr.bf16.mxu0 0
        %388 = vmatpush1.bf16.msra.mxu0 0
        %389 = vmatprep.subr.bf16.mxu0 0
        %390 = vmatpush1.bf16.msra.mxu0 0
        %391 = vmatprep.subr.bf16.mxu0 0
        %392 = vmatpush1.bf16.msra.mxu0 0
        %393 = vmatprep.subr.bf16.mxu0 0
        %394 = vmatpush1.bf16.msra.mxu0 0
        %395 = vmatprep.subr.bf16.mxu0 0
        %396 = vmatpush1.bf16.msra.mxu0 0
        %397 = vmatprep.subr.bf16.mxu0 0
        %398 = vmatpush1.bf16.msra.mxu0 0
        %399 = vmatprep.subr.bf16.mxu0 0
        %400 = vmatpush1.bf16.msra.mxu0 0
        %401 = vmatprep.subr.bf16.mxu0 0
        %402 = vmatpush1.bf16.msra.mxu0 0
        %403 = vmatprep.subr.bf16.mxu0 0
        %404 = vmatpush1.bf16.msra.mxu0 0
        %405 = vmatprep.subr.bf16.mxu0 0
        %406 = vmatpush1.bf16.msra.mxu0 0
        %407 = vmatprep.subr.bf16.mxu0 0
        %408 = vmatpush1.bf16.msra.mxu0 0
        %409 = vmatprep.subr.bf16.mxu0 0
        %410 = vmatpush1.bf16.msra.mxu0 0
        %411 = vmatprep.mubr.bf16.mxu0 0
        %412 = vmatmul.mubr.bf16.gmra.mrb[0].mxu0 %v377
        %v413 = vpop.f32.mrb[0].mxu0
        %v414 = vadd.f32 0.0, %v413
        %v415 = vpop.f32.mrb[0].mxu0
        %v416 = vpop.f32.mrb[0].mxu0
        %v417 = vpop.f32.mrb[0].mxu0
        %418 = vdwg.mxu0
        %v419 = vmul.f32 %v414, 0.125
        %v420 = vpack.c.bf16 %v419, %v419
        %v421 = vld [vmem:[%s2] sm:$0xff]
        %v422 = vld [vmem:[%s2 + $0x8] sm:$0xff]
        %v423 = vld [vmem:[%s2 + $0x10] sm:$0xff]
        %v424 = vld [vmem:[%s2 + $0x18] sm:$0xff]
        %v425 = vpack.c.bf16 %v422, %v421
        %v426 = vpack.c.bf16 %v424, %v423
        %v427 = vld [vmem:[%s3] sm:$0x1]
        %v429 = vlaneseq
        %v430 = vshrl.u32 %v429, 7
        %v431 = vsub.s32 0, %v430
        %v432 = vrot.slane %v427, %v431
        %vm434 = vcmask 261120
        %v436 = vsel %vm434, %v420, 0
        %438 = vmatprep.subr.bf16.mxu0 0
        %439 = vmatpush1.bf16.msra.mxu0 %v425
        %440 = vmatprep.subr.bf16.mxu0 0
        %441 = vmatpush1.bf16.msra.mxu0 %v426
        %442 = vmatprep.subr.bf16.mxu0 0
        %443 = vmatpush1.bf16.msra.mxu0 0
        %444 = vmatprep.subr.bf16.mxu0 0
        %445 = vmatpush1.bf16.msra.mxu0 0
        %446 = vmatprep.subr.bf16.mxu0 0
        %447 = vmatpush1.bf16.msra.mxu0 0
        %448 = vmatprep.subr.bf16.mxu0 0
        %449 = vmatpush1.bf16.msra.mxu0 0
        %450 = vmatprep.subr.bf16.mxu0 0
        %451 = vmatpush1.bf16.msra.mxu0 0
        %452 = vmatprep.subr.bf16.mxu0 0
        %453 = vmatpush1.bf16.msra.mxu0 0
        %454 = vmatprep.subr.bf16.mxu0 0
        %455 = vmatpush1.bf16.msra.mxu0 0
        %456 = vmatprep.subr.bf16.mxu0 0
        %457 = vmatpush1.bf16.msra.mxu0 0
        %458 = vmatprep.subr.bf16.mxu0 0
        %459 = vmatpush1.bf16.msra.mxu0 0
        %460 = vmatprep.subr.bf16.mxu0 0
        %461 = vmatpush1.bf16.msra.mxu0 0
        %462 = vmatprep.subr.bf16.mxu0 0
        %463 = vmatpush1.bf16.msra.mxu0 0
        %464 = vmatprep.subr.bf16.mxu0 0
        %465 = vmatpush1.bf16.msra.mxu0 0
        %466 = vmatprep.subr.bf16.mxu0 0
        %467 = vmatpush1.bf16.msra.mxu0 0
        %468 = vmatprep.subr.bf16.mxu0 0
        %469 = vmatpush1.bf16.msra.mxu0 0
        %470 = vmatprep.mubr.bf16.mxu0 0
        %471 = vmatmul.mubr.bf16.gmra.mrb[0].mxu0 %v436
        %v472 = vpop.f32.mrb[0].mxu0
        %v473 = vadd.f32 %v432, %v472
        %v474 = vpop.f32.mrb[0].mxu0
        %v475 = vpop.f32.mrb[0].mxu0
        %v476 = vpop.f32.mrb[0].mxu0
        %477 = vdwg.mxu0
        %v478 = vmax.f32 %v473, 0.0
        %v479 = vpack.c.bf16 %v478, %v478
        %v480 = vld [vmem:[%s4] sm:$0xff]
        %v481 = vld [vmem:[%s4 + $0x8] sm:$0xff]
        %v482 = vld [vmem:[%s4 + $0x10] sm:$0xff]
        %v483 = vld [vmem:[%s4 + $0x18] sm:$0xff]
        %v484 = vpack.c.bf16 %v481, %v480
        %v485 = vpack.c.bf16 %v483, %v482
        %v486 = vld [vmem:[%s5] sm:$0x1]
        %v488 = vlaneseq
        %v489 = vshrl.u32 %v488, 7
        %v490 = vsub.s32 0, %v489
        %v491 = vrot.slane %v486, %v490
        %v494 = vsel %vm434, %v479, 0
        %496 = vmatprep.subr.bf16.mxu0 0
        %497 = vmatpush1.bf16.msra.mxu0 %v484
        %498 = vmatprep.subr.bf16.mxu0 0
        %499 = vmatpush1.bf16.msra.mxu0 %v485
        %500 = vmatprep.subr.bf16.mxu0 0
        %501 = vmatpush1.bf16.msra.mxu0 0
        %502 = vmatprep.subr.bf16.mxu0 0
        %503 = vmatpush1.bf16.msra.mxu0 0
        %504 = vmatprep.subr.bf16.mxu0 0
        %505 = vmatpush1.bf16.msra.mxu0 0
        %506 = vmatprep.subr.bf16.mxu0 0
        %507 = vmatpush1.bf16.msra.mxu0 0
        %508 = vmatprep.subr.bf16.mxu0 0
        %509 = vmatpush1.bf16.msra.mxu0 0
        %510 = vmatprep.subr.bf16.mxu0 0
        %511 = vmatpush1.bf16.msra.mxu0 0
        %512 = vmatprep.subr.bf16.mxu0 0
        %513 = vmatpush1.bf16.msra.mxu0 0
        %514 = vmatprep.subr.bf16.mxu0 0
        %515 = vmatpush1.bf16.msra.mxu0 0
        %516 = vmatprep.subr.bf16.mxu0 0
        %517 = vmatpush1.bf16.msra.mxu0 0
        %518 = vmatprep.subr.bf16.mxu0 0
        %519 = vmatpush1.bf16.msra.mxu0 0
        %520 = vmatprep.subr.bf16.mxu0 0
        %521 = vmatpush1.bf16.msra.mxu0 0
        %522 = vmatprep.subr.bf16.mxu0 0
        %523 = vmatpush1.bf16.msra.mxu0 0
        %524 = vmatprep.subr.bf16.mxu0 0
        %525 = vmatpush1.bf16.msra.mxu0 0
        %526 = vmatprep.subr.bf16.mxu0 0
        %527 = vmatpush1.bf16.msra.mxu0 0
        %528 = vmatprep.mubr.bf16.mxu0 0
        %529 = vmatmul.mubr.bf16.gmra.mrb[0].mxu0 %v494
        %v530 = vpop.f32.mrb[0].mxu0
        %v531 = vadd.f32 %v491, %v530
        %v532 = vpop.f32.mrb[0].mxu0
        %v533 = vpop.f32.mrb[0].mxu0
        %v534 = vpop.f32.mrb[0].mxu0
        %535 = vdwg.mxu0
        %v536 = vmax.f32 %v531, 0.0
        %v537 = vld [vmem:[%s6] sm:$0x1]
        %v539 = vlaneseq
        %v540 = vshrl.u32 %v539, 7
        %v541 = vsub.s32 0, %v540
        %v542 = vrot.slane %v537, %v541
        %v544 = vmul.f32 %v536, %v542
        %v545 = vsel %vm434, %v544, 0.0
        %546 = vadd.xlane.f32.xlu0 %v545
        %v547 = vpop.xlane.xlu0 %546
        %s548 = sld [smem:[#allocation2]]
        %v549 = vstv %s548
        %v550 = vadd.f32 %v547, %v549
        %551 = vst [vmem:[%s297] sm:$0xff] %v550
        %s552 = sand.u32 %s204, 1
        %s553 = scalar_lea.sflag [#allocation4], %s552
        %s554 = sand.u32 %s204, 1
        %s555 = smul.addr %s554, 8
        %s556 = scalar_lea.vmem [#allocation3], %s555
        // Predicated region
        $region53: #{tpu_custom_call.1} parent=51 // pred_check
          %p557 = pneg %p214
        $region54: #{tpu_custom_call.1} parent=51 // pred_check_branch
          %559 = sbr.rel (%p557) target = $region56
        $region55: #{tpu_custom_call.1} parent=51 // pred_region
          %s561 = ssub.s32 128, 128
          %562 = vsyncadd %s553, %s561
          %s563 = smul.addr %s23, 128
          %s564 = scalar_lea.hbm %s8, %s563
          %s566 = sshll.u32 %s556, 4
          %s567 = int_to_ptr.vmem [resolvable:$true] %s566
          %569 = dma.vmem_to_hbm [thread:$0]  %s567, 128, %s564, %s553
        $region56: #{tpu_custom_call.1} parent=51 // pred_fallthru
          _
      $region52: #{tpu_custom_call.1} parent=5 // pred_fallthru
        _
      %p570 = scmp.le.s32.totalorder 2, %s18
      // Predicated region
      $region57: #{tpu_custom_call.1} parent=5 // pred_check
        %p571 = pneg %p570
      $region58: #{tpu_custom_call.1} parent=5 // pred_check_branch
        %573 = sbr.rel (%p571) target = $region60
      $region59: #{tpu_custom_call.1} parent=5 // pred_region
        %s574 = ssub.s32 %s18, 2
        // Predicated region
        $region61: #{tpu_custom_call.1} parent=59 // pred_check
          %p575 = pneg %p220
        $region62: #{tpu_custom_call.1} parent=59 // pred_check_branch
          %577 = sbr.rel (%p575) target = $region64
        $region63: #{tpu_custom_call.1} parent=59 // pred_region
          %s578 = sand.u32 %s205, 1
          %s579 = scalar_lea.sflag [#allocation4], %s578
          %s580 = sand.u32 %s205, 1
          %s581 = smul.addr %s580, 8
          %s582 = scalar_lea.vmem [#allocation3], %s581
          %583 = dma.done %s579, 128
        $region64: #{tpu_custom_call.1} parent=59 // pred_fallthru
          _
      $region60: #{tpu_custom_call.1} parent=5 // pred_fallthru
        _
    $region6: #{tpu_custom_call.1} parent=1 // loop_footer
      %s22 = sadd.s32 1, %s18
    $region7: #{tpu_custom_call.1} parent=1 // loop_footer_branch
      %17 = sbr.rel target = $region3
    $region8: #{tpu_custom_call.1} parent=1 // loop_exit
      _
    %584 = vsyncpa [#allocation4], 1
    %s585 = scalar_lea.sflag [#allocation4], 1
    %586 = vsyncpa %s585, 1

</llo_original>
